<compile_context>
chip_gen: v5e
topology: v5e:2x2
jax: 0.10.0
libtpu: 0.0.40
codegen_flags: <defaults>
</compile_context>

<pallas_src>
import functools
import math

import jax
import jax.numpy as jnp
from jax.experimental import pallas as pl
from jax.experimental.pallas import tpu as pltpu


# ---------------------------------------------------------------------------
# Kernels
# ---------------------------------------------------------------------------
def _layernorm_kernel(x_ref, a_ref, b_ref, o_ref, *, eps, feat):
    x = x_ref[...].astype(jnp.float32)      # (rows_tile, F)
    a = a_ref[...]                          # (1, F), already f32
    b = b_ref[...]                          # (1, F), already f32

    n = float(feat)
    s = jnp.sum(x, axis=-1, keepdims=True)
    sq = jnp.sum(x * x, axis=-1, keepdims=True)
    mean = s * (1.0 / n)
    # torch.std default is unbiased (ddof=1); clamp tiny negative cancellation.
    var = jnp.maximum(sq - n * mean * mean, 0.0) * (1.0 / (n - 1.0))
    std = jnp.sqrt(var)
    # NOTE: reference adds eps to std (not var) — reproduce exactly.
    inv = pl.reciprocal(std + eps, approx=False)   # per-row recip on EUP slot
    out = a * ((x - mean) * inv) + b
    o_ref[...] = out.astype(o_ref.dtype)


def _residual_add_kernel(x_ref, y_ref, o_ref):
    o_ref[...] = x_ref[...] + y_ref[...]


# ---------------------------------------------------------------------------
# Tiling helpers
# ---------------------------------------------------------------------------
_VMEM_TILE_BUDGET = 24 << 20   # bytes of live (double-buffered) tiles, all gens


def _round_up(x, m):
    return ((x + m - 1) // m) * m


def _pick_rows_per_tile(rows, feat, n_live_tiles):
    """Largest multiple-of-8 row tile fitting the VMEM budget, <=1024 rows.

    Prefers >=2 grid steps when the problem allows it (v7x shards a
    "parallel" grid axis across its 2 TensorCores).
    """
    bytes_per_row = feat * 4  # f32 compute copies
    cap = max(8, (_VMEM_TILE_BUDGET // (n_live_tiles * bytes_per_row)) // 8 * 8)
    rpt = min(1024, cap)
    if rows > 8:
        rpt = min(rpt, max(8, _round_up((rows + 1) // 2, 8)))
    else:
        rpt = 8
    return rpt


def _pad_rows(x2, rows, rows_padded):
    if rows_padded == rows:
        return x2
    return jnp.pad(x2, ((0, rows_padded - rows), (0, 0)))


# ---------------------------------------------------------------------------
# Wrappers
# ---------------------------------------------------------------------------
def layer_norm(x, a_2, b_2, eps=1e-6):
    """LayerNorm over the last axis, matching the PyTorch module's forward."""
    orig_shape = x.shape
    feat = orig_shape[-1]
    assert feat > 1, "feat == 1 would divide by zero in the unbiased variance"
    rows = math.prod(orig_shape[:-1])

    x2 = x.reshape(rows, feat)
    a2 = a_2.reshape(1, feat).astype(jnp.float32)   # cast once, stays resident
    b2 = b_2.reshape(1, feat).astype(jnp.float32)

    # Live tiles: 2x input + 2x output (double-buffered); a/b are negligible.
    rpt = _pick_rows_per_tile(rows, feat, n_live_tiles=4)
    rows_padded = _round_up(rows, rpt)
    x2 = _pad_rows(x2, rows, rows_padded)
    grid = (rows_padded // rpt,)

    # NOTE: for production hidden sizes keep `feat` a multiple of 128 so the
    # output stores are lane-dense (unmasked vst); small feat (e.g. 32 in the
    # demo) stores are masked but correct.
    out = pl.pallas_call(
        functools.partial(_layernorm_kernel, eps=eps, feat=feat),
        out_shape=jax.ShapeDtypeStruct((rows_padded, feat), x.dtype),
        grid_spec=pltpu.PrefetchScalarGridSpec(
            num_scalar_prefetch=0,
            grid=grid,
            in_specs=[
                pl.BlockSpec((rpt, feat), lambda i: (i, 0)),
                pl.BlockSpec((1, feat), lambda i: (0, 0)),
                pl.BlockSpec((1, feat), lambda i: (0, 0)),
            ],
            out_specs=pl.BlockSpec((rpt, feat), lambda i: (i, 0)),
        ),
        compiler_params=pltpu.CompilerParams(
            dimension_semantics=("parallel",),
            vmem_limit_bytes=48 << 20,
        ),
    )(x2, a2, b2)
    return out[:rows].reshape(orig_shape)


def residual_add(x, y):
    """Fused residual: x + y, tiled elementwise."""
    orig_shape = x.shape
    feat = orig_shape[-1]
    rows = math.prod(orig_shape[:-1])
    x2 = x.reshape(rows, feat)
    y2 = y.reshape(rows, feat)

    # Live tiles: 2x + 2x inputs + 2x output (double-buffered).
    rpt = _pick_rows_per_tile(rows, feat, n_live_tiles=6)
    rows_padded = _round_up(rows, rpt)
    x2 = _pad_rows(x2, rows, rows_padded)
    y2 = _pad_rows(y2, rows, rows_padded)
    grid = (rows_padded // rpt,)

    out = pl.pallas_call(
        _residual_add_kernel,
        out_shape=jax.ShapeDtypeStruct((rows_padded, feat), x.dtype),
        grid_spec=pltpu.PrefetchScalarGridSpec(
            num_scalar_prefetch=0,
            grid=grid,
            in_specs=[
                pl.BlockSpec((rpt, feat), lambda i: (i, 0)),
                pl.BlockSpec((rpt, feat), lambda i: (i, 0)),
            ],
            out_specs=pl.BlockSpec((rpt, feat), lambda i: (i, 0)),
        ),
        compiler_params=pltpu.CompilerParams(
            dimension_semantics=("parallel",),
            vmem_limit_bytes=48 << 20,
        ),
    )(x2, y2)
    return out[:rows].reshape(orig_shape)


def sublayer_connection(x, sublayer, a_2, b_2, eps=1e-6):
    """x + dropout(sublayer(LayerNorm(x))); dropout is identity in eval mode."""
    normed = layer_norm(x, a_2, b_2, eps=eps)
    y = sublayer(normed)   # arbitrary user callable, plain JAX
    # TODO(synk): training-mode dropout (PRNG keep-mask + 1/(1-p) scale) is not
    # implemented in-kernel; eval-mode dropout is identity, matching inference.
    return residual_add(x, y)


# ---------------------------------------------------------------------------
# Demo / correctness check
# ---------------------------------------------------------------------------
if __name__ == "__main__":
    key = jax.random.PRNGKey(0)
    k_x, k_w = jax.random.split(key)

    batch, seq, hidden = 2, 8, 32
    x = jax.random.normal(k_x, (batch, seq, hidden), dtype=jnp.float32)

    # Parameters matching nn.Parameter(torch.ones/zeros(features))
    a_2 = jnp.ones((hidden,), dtype=jnp.float32)
    b_2 = jnp.zeros((hidden,), dtype=jnp.float32)

    # A simple deterministic "sublayer" (linear projection).
    W = jax.random.normal(k_w, (hidden, hidden), dtype=jnp.float32) / math.sqrt(hidden)
    sublayer = lambda z: jnp.dot(z, W)

    out = sublayer_connection(x, sublayer, a_2, b_2, eps=1e-6)
    out = jax.block_until_ready(out)

    # Pure-JAX reference (unbiased std, eps added to std, dropout=identity).
    mean = jnp.mean(x, axis=-1, keepdims=True)
    std = jnp.sqrt(jnp.sum((x - mean) ** 2, axis=-1, keepdims=True) / (hidden - 1))
    normed_ref = a_2 * (x - mean) / (std + 1e-6) + b_2
    ref = x + jnp.dot(normed_ref, W)

    assert jnp.allclose(out, ref, atol=1e-5, rtol=1e-5), (
        float(jnp.max(jnp.abs(out - ref))))

    print("KERNEL_OK")
</pallas_src>

<mosaic_0001>
module attributes {stable_mosaic.version = 11 : i64} {
  func.func @_layernorm_kernel(%arg0: i32, %arg1: memref<8x32xf32, #tpu.memory_space<vmem>>, %arg2: memref<1x32xf32, #tpu.memory_space<vmem>>, %arg3: memref<1x32xf32, #tpu.memory_space<vmem>>, %arg4: memref<8x32xf32, #tpu.memory_space<vmem>>) attributes {dimension_semantics = [#tpu.dimension_semantics<parallel>], iteration_bounds = array<i64: 2>, scalar_prefetch = 0 : i64, scratch_operands = 0 : i64, tpu.core_type = #tpu.core_type<tc>, window_params = [{transform_indices = @transform_0, window_bounds = array<i64: 8, 32>}, {pipeline_mode = #tpu.pipeline_mode<synchronous>, transform_indices = @transform_1, window_bounds = array<i64: 1, 32>}, {pipeline_mode = #tpu.pipeline_mode<synchronous>, transform_indices = @transform_2, window_bounds = array<i64: 1, 32>}, {transform_indices = @transform_3, window_bounds = array<i64: 8, 32>}]} {
    %c0 = arith.constant 0 : index
    %c0_0 = arith.constant 0 : index
    %0 = vector.load %arg1[%c0, %c0_0] : memref<8x32xf32, #tpu.memory_space<vmem>>, vector<8x32xf32>
    %c0_1 = arith.constant 0 : index
    %c0_2 = arith.constant 0 : index
    %1 = vector.load %arg2[%c0_1, %c0_2] : memref<1x32xf32, #tpu.memory_space<vmem>>, vector<1x32xf32>
    %c0_3 = arith.constant 0 : index
    %c0_4 = arith.constant 0 : index
    %2 = vector.load %arg3[%c0_3, %c0_4] : memref<1x32xf32, #tpu.memory_space<vmem>>, vector<1x32xf32>
    %cst = arith.constant dense<0.000000e+00> : vector<8xf32>
    %3 = vector.multi_reduction <add>, %0, %cst [1] : vector<8x32xf32> to vector<8xf32>
    %4 = vector.shape_cast %3 : vector<8xf32> to vector<8x1xf32>
    %5 = arith.mulf %0, %0 : vector<8x32xf32>
    %cst_5 = arith.constant dense<0.000000e+00> : vector<8xf32>
    %6 = vector.multi_reduction <add>, %5, %cst_5 [1] : vector<8x32xf32> to vector<8xf32>
    %7 = vector.shape_cast %6 : vector<8xf32> to vector<8x1xf32>
    %cst_6 = arith.constant 3.125000e-02 : f32
    %8 = vector.broadcast %cst_6 : f32 to vector<8x1xf32>
    %9 = arith.mulf %4, %8 : vector<8x1xf32>
    %cst_7 = arith.constant 3.200000e+01 : f32
    %10 = vector.broadcast %cst_7 : f32 to vector<8x1xf32>
    %11 = arith.mulf %10, %9 : vector<8x1xf32>
    %12 = arith.mulf %11, %9 : vector<8x1xf32>
    %13 = arith.subf %7, %12 : vector<8x1xf32>
    %cst_8 = arith.constant 0.000000e+00 : f32
    %14 = vector.broadcast %cst_8 : f32 to vector<8x1xf32>
    %15 = arith.maximumf %13, %14 : vector<8x1xf32>
    %cst_9 = arith.constant 0.0322580636 : f32
    %16 = vector.broadcast %cst_9 : f32 to vector<8x1xf32>
    %17 = arith.mulf %15, %16 : vector<8x1xf32>
    %18 = math.sqrt %17 : vector<8x1xf32>
    %cst_10 = arith.constant 9.99999997E-7 : f32
    %19 = vector.broadcast %cst_10 : f32 to vector<8x1xf32>
    %20 = arith.addf %18, %19 : vector<8x1xf32>
    %21 = tpu.reciprocal %20 : vector<8x1xf32> -> vector<8x1xf32>
    %22 = vector.broadcast %9 : vector<8x1xf32> to vector<8x32xf32>
    %23 = arith.subf %0, %22 : vector<8x32xf32>
    %24 = vector.broadcast %21 : vector<8x1xf32> to vector<8x32xf32>
    %25 = arith.mulf %23, %24 : vector<8x32xf32>
    %26 = vector.broadcast %1 : vector<1x32xf32> to vector<8x32xf32>
    %27 = arith.mulf %26, %25 : vector<8x32xf32>
    %28 = vector.broadcast %2 : vector<1x32xf32> to vector<8x32xf32>
    %29 = arith.addf %27, %28 : vector<8x32xf32>
    %c0_11 = arith.constant 0 : index
    %c0_12 = arith.constant 0 : index
    %30 = vector.load %arg4[%c0_11, %c0_12] : memref<8x32xf32, #tpu.memory_space<vmem>>, vector<8x32xf32>
    tpu.vector_store %arg4[%c0_11, %c0_12], %29 {strides = array<i32>} : memref<8x32xf32, #tpu.memory_space<vmem>>, vector<8x32xf32>,
    return
  }
  func.func @transform_0(%arg0: i32) -> (i32, i32) {
    %c0_i32 = arith.constant 0 : i32
    %c0_i32_0 = arith.constant 0 : i32
    return %arg0, %c0_i32 : i32, i32
  }
  func.func @transform_1(%arg0: i32) -> (i32, i32) {
    %c0_i32 = arith.constant 0 : i32
    %c0_i32_0 = arith.constant 0 : i32
    %c0_i32_1 = arith.constant 0 : i32
    return %c0_i32, %c0_i32_0 : i32, i32
  }
  func.func @transform_2(%arg0: i32) -> (i32, i32) {
    %c0_i32 = arith.constant 0 : i32
    %c0_i32_0 = arith.constant 0 : i32
    %c0_i32_1 = arith.constant 0 : i32
    return %c0_i32, %c0_i32_0 : i32, i32
  }
  func.func @transform_3(%arg0: i32) -> (i32, i32) {
    %c0_i32 = arith.constant 0 : i32
    %c0_i32_0 = arith.constant 0 : i32
    return %arg0, %c0_i32 : i32, i32
  }
}

</mosaic_0001>

<llo_original>
// kernel: tpu_custom_call.1
$region0: #{tpu_custom_call.1}
  #allocation0 [shape = 'u32[]', space=smem, size = 0x4, offset = 0x4, fixed_abs, tag = 'smem constant byte address 0x4 - core index']
  #allocation1 [shape = 'u32[72,128]{1,0:T(1,128)}', space=vmem, size = 0x9000, scoped, tag = 'internal scratch']
  %s0 = inlined_call_operand.hbm [shape: f32[16,32], index: 0, kind: input, shape index: {}]
  %s1 = inlined_call_operand.hbm [shape: f32[1,32], index: 1, kind: input, shape index: {}]
  %s2 = inlined_call_operand.vmem [shape: f32[1,32], index: 2, kind: input, shape index: {}]
  %s3 = inlined_call_operand.hbm [shape: f32[16,32], index: 3, kind: output, shape index: {}]
  %s4 = sld [smem:[#allocation0]]
  $region53: #{tpu_custom_call.1} parent=0
    _
  %s6 = ssub.s32 1, %s4
  %s7 = scalar_select 0, %s6, %s4
  $region1: #{tpu_custom_call.1} parent=0
    #allocation2 [shape = 'u8[8192]{0}', space=vmem, size = 0x2000, scoped, tag = 'input window, operand 0']
    #allocation3 [shape = 's32[2]{0}', space=sflag, size = 0x8, scoped, tag = 'scoped memory for tpu_custom_call.1']
    #allocation4 [shape = 's32[2]{0}', space=sflag, size = 0x8, scoped, tag = 'scoped memory for tpu_custom_call.1']
    #allocation5 [shape = 'u8[512]{0}', space=vmem, size = 0x400, scoped, tag = 'input window, operand 1, single buffered']
    #allocation6 [shape = 's32[1]{0}', space=sflag, size = 0x4, scoped, tag = 'scoped memory for tpu_custom_call.1']
    #allocation7 [shape = 'u8[8192]{0}', space=vmem, size = 0x2000, scoped, tag = 'output window, operand 0']
    %8 = vsyncpa [#allocation3], 0
    %s9 = scalar_lea.sflag [#allocation3], 1
    %10 = vsyncpa %s9, 0
    %11 = vsyncpa [#allocation6], 0
    %12 = vsyncpa [#allocation4], 0
    %s13 = scalar_lea.sflag [#allocation4], 1
    %14 = vsyncpa %s13, 0
    loop: start=0, step=1, limit=4
    $region2: #{tpu_custom_call.1} parent=1 // loop_pre_header
      _
    $region3: #{tpu_custom_call.1} parent=1 // loop_header
      %s16 = sphi 0, %s20
      %p17 = scmp.ge.s32.totalorder %s16, 4
      %s26 = sphi 0, %s28
      %s29 = sphi 0, %s26
      %s30 = sphi 0, %s29
      %s46 = sphi 0, %s30
      %s50 = sphi 0, %s50
      %s52 = sphi 0, %s50
      %s53 = sphi 0, %s52
      %s67 = sphi 0, %s53
      %s71 = sphi 0, %s71
      %s73 = sphi 0, %s71
      %s74 = sphi 0, %s73
      %s88 = sphi 0, %s74
      %s94 = sphi 0, %s96
      %s97 = sphi 0, %s94
      %s98 = sphi 0, %s97
      %s114 = sphi 0, %s98
    $region4: #{tpu_custom_call.1} parent=1 // loop_header_branch
      %19 = sbr.rel (%p17) target = $region8
    $region5: #{tpu_custom_call.1} parent=1 // loop_body
      %s21 = ssub.s32 %s16, 1
      %s22 = ssub.s32 %s16, 2
      %s23 = sadd.s32 %s16, 1
      %s24 = ssub.s32 %s16, %s23
      %p25 = scmp.eq.s32.totalorder %s24, 0
      %s27 = sadd.s32 %s26, 1
      %s28 = scalar_select %p25, %s26, %s27
      %p31 = pneg %p25
      %p32 = scmp.eq.s32.totalorder %s16, 1
      %p33 = por %p31, %p32
      %p34 = scmp.ne.s32.totalorder %s26, %s29
      %p35 = scmp.eq.s32.totalorder %s16, 0
      %p36 = por %p34, %p35
      %p37 = scmp.ne.s32.totalorder %s26, %s29
      %p38 = scmp.eq.s32.totalorder %s21, 1
      %p39 = por %p37, %p38
      %p40 = scmp.ne.s32.totalorder %s29, %s30
      %p41 = scmp.eq.s32.totalorder %s21, 0
      %p42 = por %p40, %p41
      %p43 = scmp.ne.s32.totalorder %s29, %s30
      %p44 = scmp.eq.s32.totalorder %s22, 1
      %p45 = por %p43, %p44
      %p47 = scmp.ne.s32.totalorder %s30, %s46
      %p48 = scmp.eq.s32.totalorder %s22, 0
      %p49 = por %p47, %p48
      %s51 = sadd.s32 %s50, 1
      %p54 = scmp.eq.s32.totalorder %s16, 1
      %p55 = scmp.ne.s32.totalorder %s50, %s52
      %p56 = scmp.eq.s32.totalorder %s16, 0
      %p57 = por %p55, %p56
      %p58 = scmp.ne.s32.totalorder %s50, %s52
      %p59 = scmp.eq.s32.totalorder %s21, 1
      %p60 = por %p58, %p59
      %p61 = scmp.ne.s32.totalorder %s52, %s53
      %p62 = scmp.eq.s32.totalorder %s21, 0
      %p63 = por %p61, %p62
      %p64 = scmp.ne.s32.totalorder %s52, %s53
      %p65 = scmp.eq.s32.totalorder %s22, 1
      %p66 = por %p64, %p65
      %p68 = scmp.ne.s32.totalorder %s53, %s67
      %p69 = scmp.eq.s32.totalorder %s22, 0
      %p70 = por %p68, %p69
      %s72 = sadd.s32 %s71, 1
      %p75 = scmp.eq.s32.totalorder %s16, 1
      %p76 = scmp.ne.s32.totalorder %s71, %s73
      %p77 = scmp.eq.s32.totalorder %s16, 0
      %p78 = por %p76, %p77
      %p79 = scmp.ne.s32.totalorder %s71, %s73
      %p80 = scmp.eq.s32.totalorder %s21, 1
      %p81 = por %p79, %p80
      %p82 = scmp.ne.s32.totalorder %s73, %s74
      %p83 = scmp.eq.s32.totalorder %s21, 0
      %p84 = por %p82, %p83
      %p85 = scmp.ne.s32.totalorder %s73, %s74
      %p86 = scmp.eq.s32.totalorder %s22, 1
      %p87 = por %p85, %p86
      %p89 = scmp.ne.s32.totalorder %s74, %s88
      %p90 = scmp.eq.s32.totalorder %s22, 0
      %p91 = por %p89, %p90
      %s92 = ssub.s32 %s16, %s23
      %p93 = scmp.eq.s32.totalorder %s92, 0
      %s95 = sadd.s32 %s94, 1
      %s96 = scalar_select %p93, %s94, %s95
      %p99 = pneg %p93
      %p100 = scmp.eq.s32.totalorder %s16, 1
      %p101 = por %p99, %p100
      %p102 = scmp.ne.s32.totalorder %s94, %s97
      %p103 = scmp.eq.s32.totalorder %s16, 0
      %p104 = por %p102, %p103
      %p105 = scmp.ne.s32.totalorder %s94, %s97
      %p106 = scmp.eq.s32.totalorder %s21, 1
      %p107 = por %p105, %p106
      %p108 = scmp.ne.s32.totalorder %s97, %s98
      %p109 = scmp.eq.s32.totalorder %s21, 0
      %p110 = por %p108, %p109
      %p111 = scmp.ne.s32.totalorder %s97, %s98
      %p112 = scmp.eq.s32.totalorder %s22, 1
      %p113 = por %p111, %p112
      %p115 = scmp.ne.s32.totalorder %s98, %s114
      %p116 = scmp.eq.s32.totalorder %s22, 0
      %p117 = por %p115, %p116
      %p118 = scmp.le.s32.totalorder 1, %s16
      %p119 = scmp.lt.s32.totalorder %s16, 3
      %p120 = pnand %p118, %p119
      %p121 = pneg %p120
      // Predicated region
      $region9: #{tpu_custom_call.1} parent=5 // pred_check
        _
      $region10: #{tpu_custom_call.1} parent=5 // pred_check_branch
        %123 = sbr.rel (%p120) target = $region12
      $region11: #{tpu_custom_call.1} parent=5 // pred_region
        %s124 = ssub.s32 %s16, 1
        // Predicated region
        $region13: #{tpu_custom_call.1} parent=11 // pred_check
          %p125 = pneg %p63
        $region14: #{tpu_custom_call.1} parent=11 // pred_check_branch
          %127 = sbr.rel (%p125) target = $region16
        $region15: #{tpu_custom_call.1} parent=11 // pred_region
          %129 = vsyncadd [#allocation6], 0
          %s131 = sshll.u32 %s1, 4
          %s132 = int_to_ptr.hbm [resolvable:$true] %s131
          %s133 = sshll.u32 [#allocation5], 4
          %s134 = int_to_ptr.vmem [resolvable:$true] %s133
          %136 = dma.hbm_to_vmem [thread:$0]  %s132, 16, %s134, [#allocation6]
        $region16: #{tpu_custom_call.1} parent=11 // pred_fallthru
          _
        // Predicated region
        $region17: #{tpu_custom_call.1} parent=11 // pred_check
          %p137 = pneg %p84
        $region18: #{tpu_custom_call.1} parent=11 // pred_check_branch
          %139 = sbr.rel (%p137) target = $region20
        $region19: #{tpu_custom_call.1} parent=11 // pred_region
          _
        $region20: #{tpu_custom_call.1} parent=11 // pred_fallthru
          _
      $region12: #{tpu_custom_call.1} parent=5 // pred_fallthru
        _
      %p140 = scmp.lt.s32.totalorder %s16, 2
      // Predicated region
      $region21: #{tpu_custom_call.1} parent=5 // pred_check
        %p141 = pneg %p140
      $region22: #{tpu_custom_call.1} parent=5 // pred_check_branch
        %143 = sbr.rel (%p141) target = $region24
      $region23: #{tpu_custom_call.1} parent=5 // pred_region
        // Predicated region
        $region25: #{tpu_custom_call.1} parent=23 // pred_check
          %p144 = pneg %p36
        $region26: #{tpu_custom_call.1} parent=23 // pred_check_branch
          %146 = sbr.rel (%p144) target = $region28
        $region27: #{tpu_custom_call.1} parent=23 // pred_region
          %s147 = sand.u32 %s26, 1
          %s148 = scalar_lea.sflag [#allocation3], %s147
          %s149 = sand.u32 %s26, 1
          %s150 = smul.addr %s149, 8
          %s151 = scalar_lea.vmem [#allocation2], %s150
          %153 = vsyncadd %s148, 0
          %s154 = smul.addr %s16, 8
          %s155 = scalar_lea.hbm %s0, %s154
          %s157 = sshll.u32 %s155, 4
          %s158 = int_to_ptr.hbm [resolvable:$true] %s157
          %s159 = sshll.u32 %s151, 4
          %s160 = int_to_ptr.vmem [resolvable:$true] %s159
          %162 = dma.hbm_to_vmem [thread:$0]  %s158, 128, %s160, %s148
        $region28: #{tpu_custom_call.1} parent=23 // pred_fallthru
          _
      $region24: #{tpu_custom_call.1} parent=5 // pred_fallthru
        _
      %p163 = scmp.le.s32.totalorder 1, %s16
      %p164 = scmp.lt.s32.totalorder %s16, 3
      %p165 = pnand %p163, %p164
      %p166 = pneg %p165
      // Predicated region
      $region29: #{tpu_custom_call.1} parent=5 // pred_check
        _
      $region30: #{tpu_custom_call.1} parent=5 // pred_check_branch
        %168 = sbr.rel (%p165) target = $region32
      $region31: #{tpu_custom_call.1} parent=5 // pred_region
        %s169 = ssub.s32 %s16, 1
        %s170 = sand.u32 %s29, 1
        %s171 = scalar_lea.sflag [#allocation3], %s170
        %s172 = sand.u32 %s29, 1
        %s173 = smul.addr %s172, 8
        %s174 = scalar_lea.vmem [#allocation2], %s173
        // Predicated region
        $region33: #{tpu_custom_call.1} parent=31 // pred_check
          %p175 = pneg %p42
        $region34: #{tpu_custom_call.1} parent=31 // pred_check_branch
          %177 = sbr.rel (%p175) target = $region36
        $region35: #{tpu_custom_call.1} parent=31 // pred_region
          %179 = dma.done %s171, 128
        $region36: #{tpu_custom_call.1} parent=31 // pred_fallthru
          _
        // Predicated region
        $region37: #{tpu_custom_call.1} parent=31 // pred_check
          %p180 = pneg %p63
        $region38: #{tpu_custom_call.1} parent=31 // pred_check_branch
          %182 = sbr.rel (%p180) target = $region40
        $region39: #{tpu_custom_call.1} parent=31 // pred_region
          %184 = dma.done [#allocation6], 16
        $region40: #{tpu_custom_call.1} parent=31 // pred_fallthru
          _
        %s185 = sand.u32 %s29, 1
        %s186 = scalar_lea.sflag [#allocation3], %s185
        %s187 = sand.u32 %s29, 1
        %s188 = smul.addr %s187, 8
        %s189 = scalar_lea.vmem [#allocation2], %s188
        %p190 = pneg %p42
        %p191 = pneg %p39
        %p192 = pneg %p63
        %p193 = pneg %p60
        %p194 = pneg %p84
        %p195 = pneg %p81
        %p196 = pneg %p110
        %p197 = pneg %p107
        %s198 = sand.u32 %s97, 1
        %s199 = scalar_lea.sflag [#allocation4], %s198
        %s200 = sand.u32 %s97, 1
        %s201 = smul.addr %s200, 8
        %s202 = scalar_lea.vmem [#allocation7], %s201
        %v203 = vld [vmem:[%s174] sm:$0xff]
        %v204 = vld [vmem:[#allocation5] sm:$0x1]
        %v205 = vld [vmem:[%s2] sm:$0x1]
        %vm206 = vcmask 261120
        %v207 = vsel %vm206, %v203, 0.0
        %208 = vadd.xlane.f32.xlu0 %v207
        %v209 = vpop.xlane.xlu0 %208
        %v210 = vmul.f32 %v203, %v203
        %v211 = vsel %vm206, %v210, 0.0
        %212 = vadd.xlane.f32.xlu0 %v211
        %v213 = vpop.xlane.xlu0 %212
        %v214 = vmul.f32 %v209, 0.03125
        %v215 = vmul.f32 %v214, 32.0
        %v216 = vmul.f32 %v215, %v214
        %v217 = vsub.f32 %v213, %v216
        %v218 = vmax.f32 %v217, 0.0
        %v219 = vmul.f32 %v218, 0.032258064
        %v220 = vrsqrt.pop %v219
        %v221 = vmul.f32 %v220, %v219
        %v222 = vmul.f32 %v221, %v220
        %v223 = vmul.f32 0.5, %v222
        %v224 = vsub.f32 1.5, %v223
        %v225 = vmul.f32 %v220, %v224
        %v226 = vmul.f32 %v219, %v225
        %vm227 = vcmp.eq.f32.partialorder %v219, inf
        %v228 = vsel %vm227, %v219, %v226
        %vm229 = vcmp.eq.f32.partialorder %v219, 0.0
        %v230 = vand.u32 %v219, 2147483648
        %v231 = vsel %vm229, %v230, %v228
        %v232 = vadd.f32 %v231, 1e-06
        %v233 = vrcp.pop %v232
        %v234 = vmul.f32 %v232, %v233
        %v235 = vsub.f32 1.0, %v234
        %v236 = vmul.f32 %v233, %v235
        %v237 = vadd.f32 %v233, %v236
        %vm238 = vweird.f32 %v232
        %vm239 = vweird.f32 %v233
        %vm240 = vmor %vm238, %vm239
        %v241 = vsel %vm240, %v233, %v237
        %v242 = vand.u32 2147483647, %v232
        %vm243 = vcmp.eq.f32.partialorder %v242, 8.507059e+37
        %v244 = vand.u32 %v232, 2147483648
        %v245 = vor.u32 1.1754944e-38, %v244
        %v246 = vsel %vm243, %v245, %v241
        %v247 = vsub.f32 %v203, %v214
        %v248 = vmul.f32 %v247, %v246
        %v250 = vperm.slane %v204, 0
        %v252 = vmul.f32 %v250, %v248
        %v254 = vperm.slane %v205, 0
        %v256 = vadd.f32 %v252, %v254
        %257 = vst.msk [vmem:[%s202] sm:$0xff] %vm206, %v256
        %s258 = sand.u32 %s97, 1
        %s259 = scalar_lea.sflag [#allocation4], %s258
        %s260 = sand.u32 %s97, 1
        %s261 = smul.addr %s260, 8
        %s262 = scalar_lea.vmem [#allocation7], %s261
        // Predicated region
        $region41: #{tpu_custom_call.1} parent=31 // pred_check
          %p263 = pneg %p107
        $region42: #{tpu_custom_call.1} parent=31 // pred_check_branch
          %265 = sbr.rel (%p263) target = $region44
        $region43: #{tpu_custom_call.1} parent=31 // pred_region
          %267 = vsyncadd %s259, 0
          %s268 = smul.addr %s21, 8
          %s269 = scalar_lea.hbm %s3, %s268
          %s271 = sshll.u32 %s262, 4
          %s272 = int_to_ptr.vmem [resolvable:$true] %s271
          %s273 = sshll.u32 %s269, 4
          %s274 = int_to_ptr.hbm [resolvable:$true] %s273
          %276 = dma.vmem_to_hbm [thread:$0]  %s272, 128, %s274, %s259
        $region44: #{tpu_custom_call.1} parent=31 // pred_fallthru
          _
      $region32: #{tpu_custom_call.1} parent=5 // pred_fallthru
        _
      %p277 = scmp.le.s32.totalorder 2, %s16
      // Predicated region
      $region45: #{tpu_custom_call.1} parent=5 // pred_check
        %p278 = pneg %p277
      $region46: #{tpu_custom_call.1} parent=5 // pred_check_branch
        %280 = sbr.rel (%p278) target = $region48
      $region47: #{tpu_custom_call.1} parent=5 // pred_region
        %s281 = ssub.s32 %s16, 2
        // Predicated region
        $region49: #{tpu_custom_call.1} parent=47 // pred_check
          %p282 = pneg %p113
        $region50: #{tpu_custom_call.1} parent=47 // pred_check_branch
          %284 = sbr.rel (%p282) target = $region52
        $region51: #{tpu_custom_call.1} parent=47 // pred_region
          %s285 = sand.u32 %s98, 1
          %s286 = scalar_lea.sflag [#allocation4], %s285
          %s287 = sand.u32 %s98, 1
          %s288 = smul.addr %s287, 8
          %s289 = scalar_lea.vmem [#allocation7], %s288
          %291 = dma.done %s286, 128
        $region52: #{tpu_custom_call.1} parent=47 // pred_fallthru
          _
      $region48: #{tpu_custom_call.1} parent=5 // pred_fallthru
        _
    $region6: #{tpu_custom_call.1} parent=1 // loop_footer
      %s20 = sadd.s32 1, %s16
    $region7: #{tpu_custom_call.1} parent=1 // loop_footer_branch
      %15 = sbr.rel target = $region3
    $region8: #{tpu_custom_call.1} parent=1 // loop_exit
      _
    %292 = vsyncpa [#allocation3], 1
    %s293 = scalar_lea.sflag [#allocation3], 1
    %294 = vsyncpa %s293, 1
    %295 = vsyncpa [#allocation6], 1
    %296 = vsyncpa [#allocation4], 1
    %s297 = scalar_lea.sflag [#allocation4], 1
    %298 = vsyncpa %s297, 1

</llo_original>
